<compile_context>
chip_gen: v6e
topology: v6e:2x2x1
jax: 0.10.0
libtpu: 0.0.40
codegen_flags: <defaults>
</compile_context>

<pallas_src>
import functools

import numpy as np
import jax
import jax.numpy as jnp
from jax import lax
from jax.experimental import pallas as pl
from jax.experimental.pallas import tpu as pltpu


# ---------------------------------------------------------------------------
# Fused CrossAttention kernel (single grid step, all operands in VMEM)
# ---------------------------------------------------------------------------
def _cross_attention_kernel(f1_ref, f2_ref, w1_ref, w2_ref, vec_ref, o_ref,
                            *, hidden_dim):
    H = hidden_dim
    # bf16 activations feeding bf16 weights; f32 accumulation on the MXU.
    f1 = f1_ref[...].astype(jnp.bfloat16)                 # (B, D1)
    f2 = f2_ref[...].astype(jnp.bfloat16)                 # (B, D2)

    # Fused projections: [Q | mlp(f1)] and [K | V] — one MXU pass per input.
    qm = jnp.dot(f1, w1_ref[...], preferred_element_type=jnp.float32)   # (B, 2H)
    kv = jnp.dot(f2, w2_ref[...], preferred_element_type=jnp.float32)   # (B, 2H)

    # Packed per-feature vectors: rows = [b_q, b_k, s1, t1', s2, t2'].
    b_q = vec_ref[0:1, :]
    b_k = vec_ref[1:2, :]
    s1 = vec_ref[2:3, :]
    t1 = vec_ref[3:4, :]
    s2 = vec_ref[4:5, :]
    t2 = vec_ref[5:6, :]

    q = qm[:, :H] + b_q                                   # (B, H)
    m = qm[:, H:]                                         # mlp pre-BN (bias folded into t1)
    k = kv[:, :H] + b_k
    v = kv[:, H:]                                         # value (bias folded into t2)

    # Scaled dot-product attention over the batch axis (scores are (B, B)),
    # exactly as in the reference (2-D inputs).
    s = lax.dot_general(q, k, (((1,), (1,)), ((), ())),
                        preferred_element_type=jnp.float32) * (1.0 / np.sqrt(H))
    s = s - jnp.max(s, axis=-1, keepdims=True)
    e = jnp.exp(s)
    inv = pl.reciprocal(jnp.sum(e, axis=-1, keepdims=True), approx=True)  # EUP, VALU-free
    p = e * inv
    att = jnp.dot(p, v, preferred_element_type=jnp.float32)              # (B, H)

    # features1 branch: ReLU(BN1(mlp(features1)))  (BN + mlp bias folded)
    f1p = jnp.maximum(m * s1 + t1, 0.0)

    # BN2(attended + features1)   (value bias folded into t2)
    o_ref[...] = (att + f1p) * s2 + t2


def bn_fold(bn, eps=1e-5):
    s = bn["g"] / jnp.sqrt(bn["v"] + eps)
    t = bn["b"] - s * bn["m"]
    return s, t


def cross_attention(params, features1, features2):
    f1 = features1.astype(jnp.float32)
    f2 = features2.astype(jnp.float32)
    B, D1 = f1.shape
    _, D2 = f2.shape
    H = params["q"]["W"].shape[0]

    # Concatenated projection weights in bf16 (torch weight layout is (out, in)).
    w1 = jnp.concatenate([params["q"]["W"].T, params["mlp"]["W"].T],
                         axis=1).astype(jnp.bfloat16)                    # (D1, 2H)
    w2 = jnp.concatenate([params["k"]["W"].T, params["v"]["W"].T],
                         axis=1).astype(jnp.bfloat16)                    # (D2, 2H)

    # Fold BN into per-feature scale/shift; fold mlp bias into the BN1 shift
    # and the value bias into the BN2 shift (softmax rows sum to 1).
    s1, t1 = bn_fold(params["bn1"])
    s2, t2 = bn_fold(params["bn2"])
    t1 = t1 + s1 * params["mlp"]["b"]
    t2 = t2 + s2 * params["v"]["b"]
    vec = jnp.stack([params["q"]["b"], params["k"]["b"], s1, t1, s2, t2],
                    axis=0).astype(jnp.float32)                          # (6, H)

    operands = (f1, f2, w1, w2, vec)

    # Right-size the VMEM limit from the (partly bf16) operand footprint,
    # capped at 32 MiB so it stays safe on v7x (64 MiB physical per TC).
    op_bytes = sum(int(a.size) * jnp.dtype(a.dtype).itemsize for a in operands)
    op_bytes += B * H * 4
    vmem_limit = int(min(max(2 * op_bytes + (4 << 20), 8 << 20), 32 << 20))

    return pl.pallas_call(
        functools.partial(_cross_attention_kernel, hidden_dim=H),
        out_shape=jax.ShapeDtypeStruct((B, H), jnp.float32),
        in_specs=[pl.BlockSpec(memory_space=pltpu.MemorySpace.VMEM)] * len(operands),
        out_specs=pl.BlockSpec(memory_space=pltpu.MemorySpace.VMEM),
        compiler_params=pltpu.CompilerParams(vmem_limit_bytes=vmem_limit),
    )(*operands)
    # TODO(synk): for large batch / many (f1, f2) pairs, add a leading
    # "parallel" grid axis (shards across the 2 v7x TensorCores and amortizes
    # the weight DMA); at B=8, H=256 a single gridless step is optimal.


# ---------------------------------------------------------------------------
# Pure-JAX f32 reference (same eval-mode BN folding) for validation
# ---------------------------------------------------------------------------
def cross_attention_ref(params, features1, features2):
    f1 = features1.astype(jnp.float32)
    f2 = features2.astype(jnp.float32)
    H = params["q"]["W"].shape[0]
    Q = f1 @ params["q"]["W"].T + params["q"]["b"]
    K = f2 @ params["k"]["W"].T + params["k"]["b"]
    V = f2 @ params["v"]["W"].T + params["v"]["b"]
    scores = (Q @ K.T) / jnp.sqrt(jnp.float32(H))
    P = jax.nn.softmax(scores, axis=-1)
    att = P @ V
    s1, t1 = bn_fold(params["bn1"])
    s2, t2 = bn_fold(params["bn2"])
    m = f1 @ params["mlp"]["W"].T + params["mlp"]["b"]
    f1p = jnp.maximum(m * s1[None, :] + t1[None, :], 0.0)
    return (att + f1p) * s2[None, :] + t2[None, :]


# ---------------------------------------------------------------------------
# Deterministic synthetic parameters (shapes from __init__)
# ---------------------------------------------------------------------------
def init_params(key, feature_dim1, feature_dim2, hidden_dim):
    ks = iter(jax.random.split(key, 64))

    def lin(i, o):
        w = jax.random.normal(next(ks), (o, i), jnp.float32) / np.sqrt(i)
        b = 0.02 * jax.random.normal(next(ks), (o,), jnp.float32)
        return {"W": w, "b": b}

    def bn(n):
        return {"g": 1.0 + 0.1 * jax.random.normal(next(ks), (n,), jnp.float32),
                "b": 0.1 * jax.random.normal(next(ks), (n,), jnp.float32),
                "m": 0.1 * jax.random.normal(next(ks), (n,), jnp.float32),
                "v": 0.8 + 0.4 * jax.random.uniform(next(ks), (n,), jnp.float32)}

    return {"q": lin(feature_dim1, hidden_dim),
            "k": lin(feature_dim2, hidden_dim),
            "v": lin(feature_dim2, hidden_dim),
            "mlp": lin(feature_dim1, hidden_dim),
            "bn1": bn(hidden_dim),
            "bn2": bn(hidden_dim)}


if __name__ == "__main__":
    BATCH, FEAT1, FEAT2, HIDDEN = 8, 256, 384, 256

    key = jax.random.PRNGKey(0)
    k1, k2, kw = jax.random.split(key, 3)
    features1 = jax.random.normal(k1, (BATCH, FEAT1), jnp.float32)
    features2 = jax.random.normal(k2, (BATCH, FEAT2), jnp.float32)
    params = init_params(kw, FEAT1, FEAT2, HIDDEN)

    out = jax.jit(cross_attention)(params, features1, features2)
    out = jax.block_until_ready(out)

    assert out.shape == (BATCH, HIDDEN), out.shape
    assert bool(jnp.all(jnp.isfinite(out)))

    # Tolerance widened to bf16-quantization level (weights are bf16 in the
    # kernel; accumulation is f32), per the perf-review correctness note.
    ref = cross_attention_ref(params, features1, features2)
    np.testing.assert_allclose(np.asarray(out), np.asarray(ref), rtol=2e-2, atol=2e-2)

    print("KERNEL_OK")
</pallas_src>

<mosaic_0001>
module attributes {stable_mosaic.version = 11 : i64} {
  func.func @_cross_attention_kernel(%arg0: memref<8x256xf32, #tpu.memory_space<vmem>>, %arg1: memref<8x384xf32, #tpu.memory_space<vmem>>, %arg2: memref<256x512xbf16, #tpu.memory_space<vmem>>, %arg3: memref<384x512xbf16, #tpu.memory_space<vmem>>, %arg4: memref<6x256xf32, #tpu.memory_space<vmem>>, %arg5: memref<8x256xf32, #tpu.memory_space<vmem>>) attributes {dimension_semantics = [], scalar_prefetch = 0 : i64, scratch_operands = 0 : i64, tpu.core_type = #tpu.core_type<tc>} {
    %c0 = arith.constant 0 : index
    %c0_0 = arith.constant 0 : index
    %0 = vector.load %arg0[%c0, %c0_0] : memref<8x256xf32, #tpu.memory_space<vmem>>, vector<8x256xf32>
    %1 = arith.truncf %0 : vector<8x256xf32> to vector<8x256xbf16>
    %c0_1 = arith.constant 0 : index
    %c0_2 = arith.constant 0 : index
    %2 = vector.load %arg1[%c0_1, %c0_2] : memref<8x384xf32, #tpu.memory_space<vmem>>, vector<8x384xf32>
    %3 = arith.truncf %2 : vector<8x384xf32> to vector<8x384xbf16>
    %c0_3 = arith.constant 0 : index
    %c0_4 = arith.constant 0 : index
    %4 = vector.load %arg2[%c0_3, %c0_4] : memref<256x512xbf16, #tpu.memory_space<vmem>>, vector<256x512xbf16>
    %cst = arith.constant dense<0.000000e+00> : vector<8x512xf32>
    %5 = tpu.matmul %1, %4, %cst {dimension_numbers = #tpu.dot_dimension_numbers<[1], [0], [0], [1], [0, 0, 1, 1], [], []>} : vector<8x256xbf16>, vector<256x512xbf16>, vector<8x512xf32> -> vector<8x512xf32>
    %c0_5 = arith.constant 0 : index
    %c0_6 = arith.constant 0 : index
    %6 = vector.load %arg3[%c0_5, %c0_6] : memref<384x512xbf16, #tpu.memory_space<vmem>>, vector<384x512xbf16>
    %cst_7 = arith.constant dense<0.000000e+00> : vector<8x512xf32>
    %7 = tpu.matmul %3, %6, %cst_7 {dimension_numbers = #tpu.dot_dimension_numbers<[1], [0], [0], [1], [0, 0, 1, 1], [], []>} : vector<8x384xbf16>, vector<384x512xbf16>, vector<8x512xf32> -> vector<8x512xf32>
    %c0_8 = arith.constant 0 : index
    %c0_9 = arith.constant 0 : index
    %8 = vector.load %arg4[%c0_8, %c0_9] : memref<6x256xf32, #tpu.memory_space<vmem>>, vector<1x256xf32>
    %c1 = arith.constant 1 : index
    %c0_10 = arith.constant 0 : index
    %9 = vector.load %arg4[%c1, %c0_10] : memref<6x256xf32, #tpu.memory_space<vmem>>, vector<1x256xf32>
    %c2 = arith.constant 2 : index
    %c0_11 = arith.constant 0 : index
    %10 = vector.load %arg4[%c2, %c0_11] : memref<6x256xf32, #tpu.memory_space<vmem>>, vector<1x256xf32>
    %c3 = arith.constant 3 : index
    %c0_12 = arith.constant 0 : index
    %11 = vector.load %arg4[%c3, %c0_12] : memref<6x256xf32, #tpu.memory_space<vmem>>, vector<1x256xf32>
    %c4 = arith.constant 4 : index
    %c0_13 = arith.constant 0 : index
    %12 = vector.load %arg4[%c4, %c0_13] : memref<6x256xf32, #tpu.memory_space<vmem>>, vector<1x256xf32>
    %c5 = arith.constant 5 : index
    %c0_14 = arith.constant 0 : index
    %13 = vector.load %arg4[%c5, %c0_14] : memref<6x256xf32, #tpu.memory_space<vmem>>, vector<1x256xf32>
    %14 = vector.extract_strided_slice %5 {offsets = [0, 0], sizes = [8, 256], strides = [1, 1]} : vector<8x512xf32> to vector<8x256xf32>
    %15 = vector.broadcast %8 : vector<1x256xf32> to vector<8x256xf32>
    %16 = arith.addf %14, %15 : vector<8x256xf32>
    %17 = vector.extract_strided_slice %5 {offsets = [0, 256], sizes = [8, 256], strides = [1, 1]} : vector<8x512xf32> to vector<8x256xf32>
    %18 = vector.extract_strided_slice %7 {offsets = [0, 0], sizes = [8, 256], strides = [1, 1]} : vector<8x512xf32> to vector<8x256xf32>
    %19 = vector.broadcast %9 : vector<1x256xf32> to vector<8x256xf32>
    %20 = arith.addf %18, %19 : vector<8x256xf32>
    %21 = vector.extract_strided_slice %7 {offsets = [0, 256], sizes = [8, 256], strides = [1, 1]} : vector<8x512xf32> to vector<8x256xf32>
    %cst_15 = arith.constant dense<0.000000e+00> : vector<8x8xf32>
    %22 = tpu.matmul %16, %20, %cst_15 {dimension_numbers = #tpu.dot_dimension_numbers<[1], [1], [0], [0], [0, 0, 1, 0], [], []>} : vector<8x256xf32>, vector<8x256xf32>, vector<8x8xf32> -> vector<8x8xf32>
    %cst_16 = arith.constant 6.250000e-02 : f32
    %23 = vector.broadcast %cst_16 : f32 to vector<8x8xf32>
    %24 = arith.mulf %22, %23 : vector<8x8xf32>
    %cst_17 = arith.constant dense<0xFF800000> : vector<8xf32>
    %25 = vector.multi_reduction <maximumf>, %24, %cst_17 [1] : vector<8x8xf32> to vector<8xf32>
    %26 = vector.shape_cast %25 : vector<8xf32> to vector<8x1xf32>
    %27 = vector.broadcast %26 : vector<8x1xf32> to vector<8x8xf32>
    %28 = arith.subf %24, %27 : vector<8x8xf32>
    %29 = math.exp %28 : vector<8x8xf32>
    %cst_18 = arith.constant dense<0.000000e+00> : vector<8xf32>
    %30 = vector.multi_reduction <add>, %29, %cst_18 [1] : vector<8x8xf32> to vector<8xf32>
    %31 = vector.shape_cast %30 : vector<8xf32> to vector<8x1xf32>
    %32 = tpu.reciprocal %31 {approx = true} : vector<8x1xf32> -> vector<8x1xf32>
    %33 = vector.broadcast %32 : vector<8x1xf32> to vector<8x8xf32>
    %34 = arith.mulf %29, %33 : vector<8x8xf32>
    %cst_19 = arith.constant dense<0.000000e+00> : vector<8x256xf32>
    %35 = tpu.matmul %34, %21, %cst_19 {dimension_numbers = #tpu.dot_dimension_numbers<[1], [0], [0], [1], [0, 0, 1, 1], [], []>} : vector<8x8xf32>, vector<8x256xf32>, vector<8x256xf32> -> vector<8x256xf32>
    %36 = vector.broadcast %10 : vector<1x256xf32> to vector<8x256xf32>
    %37 = arith.mulf %17, %36 : vector<8x256xf32>
    %38 = vector.broadcast %11 : vector<1x256xf32> to vector<8x256xf32>
    %39 = arith.addf %37, %38 : vector<8x256xf32>
    %cst_20 = arith.constant 0.000000e+00 : f32
    %40 = vector.broadcast %cst_20 : f32 to vector<8x256xf32>
    %41 = arith.maximumf %39, %40 : vector<8x256xf32>
    %42 = arith.addf %35, %41 : vector<8x256xf32>
    %43 = vector.broadcast %12 : vector<1x256xf32> to vector<8x256xf32>
    %44 = arith.mulf %42, %43 : vector<8x256xf32>
    %45 = vector.broadcast %13 : vector<1x256xf32> to vector<8x256xf32>
    %46 = arith.addf %44, %45 : vector<8x256xf32>
    %c0_21 = arith.constant 0 : index
    %c0_22 = arith.constant 0 : index
    %47 = vector.load %arg5[%c0_21, %c0_22] : memref<8x256xf32, #tpu.memory_space<vmem>>, vector<8x256xf32>
    tpu.vector_store %arg5[%c0_21, %c0_22], %46 {strides = array<i32>} : memref<8x256xf32, #tpu.memory_space<vmem>>, vector<8x256xf32>,
    return
  }
}

</mosaic_0001>

<llo_original>
// kernel: cross_attention.1
$region0: #{cross_attention.1}
  #allocation0 [shape = 'u32[]', space=smem, size = 0x4, offset = 0x4, fixed_abs, tag = 'smem constant byte address 0x4 - core index']
  #allocation1 [shape = 'u32[144,128]{1,0:T(1,128)}', space=vmem, size = 0x12000, scoped, tag = 'internal scratch']
  %s0 = inlined_call_operand.vmem [shape: f32[8,256], index: 0, kind: input, shape index: {}]
  %s1 = inlined_call_operand.vmem [shape: f32[8,384], index: 1, kind: input, shape index: {}]
  %s2 = inlined_call_operand.vmem [shape: bf16[256,512], index: 2, kind: input, shape index: {}]
  %s3 = inlined_call_operand.vmem [shape: bf16[384,512], index: 3, kind: input, shape index: {}]
  %s4 = inlined_call_operand.vmem [shape: f32[6,256], index: 4, kind: input, shape index: {}]
  %s5 = inlined_call_operand.hbm [shape: f32[8,256], index: 5, kind: output, shape index: {}]
  %s6 = sld [smem:[#allocation0]]
  $region30: #{cross_attention.1} parent=0
    _
  %s8 = ssub.s32 1, %s6
  %s9 = scalar_select 0, %s8, %s6
  $region1: #{cross_attention.1} parent=0
    #allocation2 [shape = 'u8[8192]{0}', space=vmem, size = 0x2000, scoped, tag = 'output window, operand 0, single buffered']
    #allocation3 [shape = 's32[1]{0}', space=sflag, size = 0x4, scoped, tag = 'scoped memory for cross_attention.1']
    %10 = vsyncpa [#allocation3], 0
    // Predicated region
    $region2: #{cross_attention.1} parent=1 // pred_check
      _
    $region3: #{cross_attention.1} parent=1 // pred_check_branch
      %12 = sbr.rel (0) target = $region5
    $region4: #{cross_attention.1} parent=1 // pred_region
      _
    $region5: #{cross_attention.1} parent=1 // pred_fallthru
      _
    // Predicated region
    $region6: #{cross_attention.1} parent=1 // pred_check
      _
    $region7: #{cross_attention.1} parent=1 // pred_check_branch
      %14 = sbr.rel (0) target = $region9
    $region8: #{cross_attention.1} parent=1 // pred_region
      _
    $region9: #{cross_attention.1} parent=1 // pred_fallthru
      _
    // Predicated region
    $region10: #{cross_attention.1} parent=1 // pred_check
      _
    $region11: #{cross_attention.1} parent=1 // pred_check_branch
      %16 = sbr.rel (0) target = $region13
    $region12: #{cross_attention.1} parent=1 // pred_region
      _
    $region13: #{cross_attention.1} parent=1 // pred_fallthru
      _
    // Predicated region
    $region14: #{cross_attention.1} parent=1 // pred_check
      _
    $region15: #{cross_attention.1} parent=1 // pred_check_branch
      %18 = sbr.rel (0) target = $region17
    $region16: #{cross_attention.1} parent=1 // pred_region
      _
    $region17: #{cross_attention.1} parent=1 // pred_fallthru
      _
    // Predicated region
    $region18: #{cross_attention.1} parent=1 // pred_check
      _
    $region19: #{cross_attention.1} parent=1 // pred_check_branch
      %20 = sbr.rel (0) target = $region21
    $region20: #{cross_attention.1} parent=1 // pred_region
      _
    $region21: #{cross_attention.1} parent=1 // pred_fallthru
      _
    %v22 = vld [vmem:[%s0] sm:$0xff]
    %v23 = vld [vmem:[%s0 + $0x8] sm:$0xff]
    %v24 = vpack.c.bf16 %v22, %v22
    %v25 = vpack.c.bf16 %v23, %v23
    %v26 = vld [vmem:[%s1] sm:$0xff]
    %v27 = vld [vmem:[%s1 + $0x8] sm:$0xff]
    %v28 = vld [vmem:[%s1 + $0x10] sm:$0xff]
    %v29 = vpack.c.bf16 %v26, %v26
    %v30 = vpack.c.bf16 %v27, %v27
    %v31 = vpack.c.bf16 %v28, %v28
    %v32 = vld [vmem:[%s2] sm:$0xff]
    %v33 = vld [vmem:[%s2 + $0x8] sm:$0xff]
    %v34 = vld [vmem:[%s2 + $0x10] sm:$0xff]
    %v35 = vld [vmem:[%s2 + $0x18] sm:$0xff]
    %v36 = vld [vmem:[%s2 + $0x20] sm:$0xff]
    %v37 = vld [vmem:[%s2 + $0x28] sm:$0xff]
    %v38 = vld [vmem:[%s2 + $0x30] sm:$0xff]
    %v39 = vld [vmem:[%s2 + $0x38] sm:$0xff]
    %v40 = vld [vmem:[%s2 + $0x40] sm:$0xff]
    %v41 = vld [vmem:[%s2 + $0x48] sm:$0xff]
    %v42 = vld [vmem:[%s2 + $0x50] sm:$0xff]
    %v43 = vld [vmem:[%s2 + $0x58] sm:$0xff]
    %v44 = vld [vmem:[%s2 + $0x60] sm:$0xff]
    %v45 = vld [vmem:[%s2 + $0x68] sm:$0xff]
    %v46 = vld [vmem:[%s2 + $0x70] sm:$0xff]
    %v47 = vld [vmem:[%s2 + $0x78] sm:$0xff]
    %v48 = vld [vmem:[%s2 + $0x80] sm:$0xff]
    %v49 = vld [vmem:[%s2 + $0x88] sm:$0xff]
    %v50 = vld [vmem:[%s2 + $0x90] sm:$0xff]
    %v51 = vld [vmem:[%s2 + $0x98] sm:$0xff]
    %v52 = vld [vmem:[%s2 + $0xa0] sm:$0xff]
    %v53 = vld [vmem:[%s2 + $0xa8] sm:$0xff]
    %v54 = vld [vmem:[%s2 + $0xb0] sm:$0xff]
    %v55 = vld [vmem:[%s2 + $0xb8] sm:$0xff]
    %v56 = vld [vmem:[%s2 + $0xc0] sm:$0xff]
    %v57 = vld [vmem:[%s2 + $0xc8] sm:$0xff]
    %v58 = vld [vmem:[%s2 + $0xd0] sm:$0xff]
    %v59 = vld [vmem:[%s2 + $0xd8] sm:$0xff]
    %v60 = vld [vmem:[%s2 + $0xe0] sm:$0xff]
    %v61 = vld [vmem:[%s2 + $0xe8] sm:$0xff]
    %v62 = vld [vmem:[%s2 + $0xf0] sm:$0xff]
    %v63 = vld [vmem:[%s2 + $0xf8] sm:$0xff]
    %v64 = vld [vmem:[%s2 + $0x100] sm:$0xff]
    %v65 = vld [vmem:[%s2 + $0x108] sm:$0xff]
    %v66 = vld [vmem:[%s2 + $0x110] sm:$0xff]
    %v67 = vld [vmem:[%s2 + $0x118] sm:$0xff]
    %v68 = vld [vmem:[%s2 + $0x120] sm:$0xff]
    %v69 = vld [vmem:[%s2 + $0x128] sm:$0xff]
    %v70 = vld [vmem:[%s2 + $0x130] sm:$0xff]
    %v71 = vld [vmem:[%s2 + $0x138] sm:$0xff]
    %v72 = vld [vmem:[%s2 + $0x140] sm:$0xff]
    %v73 = vld [vmem:[%s2 + $0x148] sm:$0xff]
    %v74 = vld [vmem:[%s2 + $0x150] sm:$0xff]
    %v75 = vld [vmem:[%s2 + $0x158] sm:$0xff]
    %v76 = vld [vmem:[%s2 + $0x160] sm:$0xff]
    %v77 = vld [vmem:[%s2 + $0x168] sm:$0xff]
    %v78 = vld [vmem:[%s2 + $0x170] sm:$0xff]
    %v79 = vld [vmem:[%s2 + $0x178] sm:$0xff]
    %v80 = vld [vmem:[%s2 + $0x180] sm:$0xff]
    %v81 = vld [vmem:[%s2 + $0x188] sm:$0xff]
    %v82 = vld [vmem:[%s2 + $0x190] sm:$0xff]
    %v83 = vld [vmem:[%s2 + $0x198] sm:$0xff]
    %v84 = vld [vmem:[%s2 + $0x1a0] sm:$0xff]
    %v85 = vld [vmem:[%s2 + $0x1a8] sm:$0xff]
    %v86 = vld [vmem:[%s2 + $0x1b0] sm:$0xff]
    %v87 = vld [vmem:[%s2 + $0x1b8] sm:$0xff]
    %v88 = vld [vmem:[%s2 + $0x1c0] sm:$0xff]
    %v89 = vld [vmem:[%s2 + $0x1c8] sm:$0xff]
    %v90 = vld [vmem:[%s2 + $0x1d0] sm:$0xff]
    %v91 = vld [vmem:[%s2 + $0x1d8] sm:$0xff]
    %v92 = vld [vmem:[%s2 + $0x1e0] sm:$0xff]
    %v93 = vld [vmem:[%s2 + $0x1e8] sm:$0xff]
    %v94 = vld [vmem:[%s2 + $0x1f0] sm:$0xff]
    %v95 = vld [vmem:[%s2 + $0x1f8] sm:$0xff]
    %v160 = vunpack.c.l.b16 %v32
    %v161 = vunpack.c.h.b16 %v32
    %v162 = vunpack.c.l.b16 %v33
    %v163 = vunpack.c.h.b16 %v33
    %v164 = vunpack.c.l.b16 %v34
    %v165 = vunpack.c.h.b16 %v34
    %v166 = vunpack.c.l.b16 %v35
    %v167 = vunpack.c.h.b16 %v35
    %v168 = vunpack.c.l.b16 %v36
    %v169 = vunpack.c.h.b16 %v36
    %v170 = vunpack.c.l.b16 %v37
    %v171 = vunpack.c.h.b16 %v37
    %v172 = vunpack.c.l.b16 %v38
    %v173 = vunpack.c.h.b16 %v38
    %v174 = vunpack.c.l.b16 %v39
    %v175 = vunpack.c.h.b16 %v39
    %v176 = vunpack.c.l.b16 %v40
    %v177 = vunpack.c.h.b16 %v40
    %v178 = vunpack.c.l.b16 %v41
    %v179 = vunpack.c.h.b16 %v41
    %v180 = vunpack.c.l.b16 %v42
    %v181 = vunpack.c.h.b16 %v42
    %v182 = vunpack.c.l.b16 %v43
    %v183 = vunpack.c.h.b16 %v43
    %v184 = vunpack.c.l.b16 %v44
    %v185 = vunpack.c.h.b16 %v44
    %v186 = vunpack.c.l.b16 %v45
    %v187 = vunpack.c.h.b16 %v45
    %v188 = vunpack.c.l.b16 %v46
    %v189 = vunpack.c.h.b16 %v46
    %v190 = vunpack.c.l.b16 %v47
    %v191 = vunpack.c.h.b16 %v47
    %v192 = vunpack.c.l.b16 %v48
    %v193 = vunpack.c.h.b16 %v48
    %v194 = vunpack.c.l.b16 %v49
    %v195 = vunpack.c.h.b16 %v49
    %v196 = vunpack.c.l.b16 %v50
    %v197 = vunpack.c.h.b16 %v50
    %v198 = vunpack.c.l.b16 %v51
    %v199 = vunpack.c.h.b16 %v51
    %v200 = vunpack.c.l.b16 %v52
    %v201 = vunpack.c.h.b16 %v52
    %v202 = vunpack.c.l.b16 %v53
    %v203 = vunpack.c.h.b16 %v53
    %v204 = vunpack.c.l.b16 %v54
    %v205 = vunpack.c.h.b16 %v54
    %v206 = vunpack.c.l.b16 %v55
    %v207 = vunpack.c.h.b16 %v55
    %v208 = vunpack.c.l.b16 %v56
    %v209 = vunpack.c.h.b16 %v56
    %v210 = vunpack.c.l.b16 %v57
    %v211 = vunpack.c.h.b16 %v57
    %v212 = vunpack.c.l.b16 %v58
    %v213 = vunpack.c.h.b16 %v58
    %v214 = vunpack.c.l.b16 %v59
    %v215 = vunpack.c.h.b16 %v59
    %v216 = vunpack.c.l.b16 %v60
    %v217 = vunpack.c.h.b16 %v60
    %v218 = vunpack.c.l.b16 %v61
    %v219 = vunpack.c.h.b16 %v61
    %v220 = vunpack.c.l.b16 %v62
    %v221 = vunpack.c.h.b16 %v62
    %v222 = vunpack.c.l.b16 %v63
    %v223 = vunpack.c.h.b16 %v63
    %v224 = vunpack.c.l.b16 %v64
    %v225 = vunpack.c.h.b16 %v64
    %v226 = vunpack.c.l.b16 %v65
    %v227 = vunpack.c.h.b16 %v65
    %v228 = vunpack.c.l.b16 %v66
    %v229 = vunpack.c.h.b16 %v66
    %v230 = vunpack.c.l.b16 %v67
    %v231 = vunpack.c.h.b16 %v67
    %v232 = vunpack.c.l.b16 %v68
    %v233 = vunpack.c.h.b16 %v68
    %v234 = vunpack.c.l.b16 %v69
    %v235 = vunpack.c.h.b16 %v69
    %v236 = vunpack.c.l.b16 %v70
    %v237 = vunpack.c.h.b16 %v70
    %v238 = vunpack.c.l.b16 %v71
    %v239 = vunpack.c.h.b16 %v71
    %v240 = vunpack.c.l.b16 %v72
    %v241 = vunpack.c.h.b16 %v72
    %v242 = vunpack.c.l.b16 %v73
    %v243 = vunpack.c.h.b16 %v73
    %v244 = vunpack.c.l.b16 %v74
    %v245 = vunpack.c.h.b16 %v74
    %v246 = vunpack.c.l.b16 %v75
    %v247 = vunpack.c.h.b16 %v75
    %v248 = vunpack.c.l.b16 %v76
    %v249 = vunpack.c.h.b16 %v76
    %v250 = vunpack.c.l.b16 %v77
    %v251 = vunpack.c.h.b16 %v77
    %v252 = vunpack.c.l.b16 %v78
    %v253 = vunpack.c.h.b16 %v78
    %v254 = vunpack.c.l.b16 %v79
    %v255 = vunpack.c.h.b16 %v79
    %v256 = vunpack.c.l.b16 %v80
    %v257 = vunpack.c.h.b16 %v80
    %v258 = vunpack.c.l.b16 %v81
    %v259 = vunpack.c.h.b16 %v81
    %v260 = vunpack.c.l.b16 %v82
    %v261 = vunpack.c.h.b16 %v82
    %v262 = vunpack.c.l.b16 %v83
    %v263 = vunpack.c.h.b16 %v83
    %v264 = vunpack.c.l.b16 %v84
    %v265 = vunpack.c.h.b16 %v84
    %v266 = vunpack.c.l.b16 %v85
    %v267 = vunpack.c.h.b16 %v85
    %v268 = vunpack.c.l.b16 %v86
    %v269 = vunpack.c.h.b16 %v86
    %v270 = vunpack.c.l.b16 %v87
    %v271 = vunpack.c.h.b16 %v87
    %v272 = vunpack.c.l.b16 %v88
    %v273 = vunpack.c.h.b16 %v88
    %v274 = vunpack.c.l.b16 %v89
    %v275 = vunpack.c.h.b16 %v89
    %v276 = vunpack.c.l.b16 %v90
    %v277 = vunpack.c.h.b16 %v90
    %v278 = vunpack.c.l.b16 %v91
    %v279 = vunpack.c.h.b16 %v91
    %v280 = vunpack.c.l.b16 %v92
    %v281 = vunpack.c.h.b16 %v92
    %v282 = vunpack.c.l.b16 %v93
    %v283 = vunpack.c.h.b16 %v93
    %v284 = vunpack.c.l.b16 %v94
    %v285 = vunpack.c.h.b16 %v94
    %v286 = vunpack.c.l.b16 %v95
    %v287 = vunpack.c.h.b16 %v95
    %v288 = vpack.c.b16 %v164, %v160
    %v289 = vpack.c.b16 %v165, %v161
    %v290 = vpack.c.b16 %v166, %v162
    %v291 = vpack.c.b16 %v167, %v163
    %v292 = vpack.c.b16 %v172, %v168
    %v293 = vpack.c.b16 %v173, %v169
    %v294 = vpack.c.b16 %v174, %v170
    %v295 = vpack.c.b16 %v175, %v171
    %v296 = vpack.c.b16 %v180, %v176
    %v297 = vpack.c.b16 %v181, %v177
    %v298 = vpack.c.b16 %v182, %v178
    %v299 = vpack.c.b16 %v183, %v179
    %v300 = vpack.c.b16 %v188, %v184
    %v301 = vpack.c.b16 %v189, %v185
    %v302 = vpack.c.b16 %v190, %v186
    %v303 = vpack.c.b16 %v191, %v187
    %v304 = vpack.c.b16 %v196, %v192
    %v305 = vpack.c.b16 %v197, %v193
    %v306 = vpack.c.b16 %v198, %v194
    %v307 = vpack.c.b16 %v199, %v195
    %v308 = vpack.c.b16 %v204, %v200
    %v309 = vpack.c.b16 %v205, %v201
    %v310 = vpack.c.b16 %v206, %v202
    %v311 = vpack.c.b16 %v207, %v203
    %v312 = vpack.c.b16 %v212, %v208
    %v313 = vpack.c.b16 %v213, %v209
    %v314 = vpack.c.b16 %v214, %v210
    %v315 = vpack.c.b16 %v215, %v211
    %v316 = vpack.c.b16 %v220, %v216
    %v317 = vpack.c.b16 %v221, %v217
    %v318 = vpack.c.b16 %v222, %v218
    %v319 = vpack.c.b16 %v223, %v219
    %v320 = vpack.c.b16 %v228, %v224
    %v321 = vpack.c.b16 %v229, %v225
    %v322 = vpack.c.b16 %v230, %v226
    %v323 = vpack.c.b16 %v231, %v227
    %v324 = vpack.c.b16 %v236, %v232
    %v325 = vpack.c.b16 %v237, %v233
    %v326 = vpack.c.b16 %v238, %v234
    %v327 = vpack.c.b16 %v239, %v235
    %v328 = vpack.c.b16 %v244, %v240
    %v329 = vpack.c.b16 %v245, %v241
    %v330 = vpack.c.b16 %v246, %v242
    %v331 = vpack.c.b16 %v247, %v243
    %v332 = vpack.c.b16 %v252, %v248
    %v333 = vpack.c.b16 %v253, %v249
    %v334 = vpack.c.b16 %v254, %v250
    %v335 = vpack.c.b16 %v255, %v251
    %v336 = vpack.c.b16 %v260, %v256
    %v337 = vpack.c.b16 %v261, %v257
    %v338 = vpack.c.b16 %v262, %v258
    %v339 = vpack.c.b16 %v263, %v259
    %v340 = vpack.c.b16 %v268, %v264
    %v341 = vpack.c.b16 %v269, %v265
    %v342 = vpack.c.b16 %v270, %v266
    %v343 = vpack.c.b16 %v271, %v267
    %v344 = vpack.c.b16 %v276, %v272
    %v345 = vpack.c.b16 %v277, %v273
    %v346 = vpack.c.b16 %v278, %v274
    %v347 = vpack.c.b16 %v279, %v275
    %v348 = vpack.c.b16 %v284, %v280
    %v349 = vpack.c.b16 %v285, %v281
    %v350 = vpack.c.b16 %v286, %v282
    %v351 = vpack.c.b16 %v287, %v283
    %416 = vmatprep.subr.bf16.mxu0 %v317
    %417 = vmatpush1.bf16.msra.mxu0 %v316
    %418 = vmatprep.subr.bf16.mxu0 %v313
    %419 = vmatpush1.bf16.msra.mxu0 %v312
    %420 = vmatprep.subr.bf16.mxu0 %v309
    %421 = vmatpush1.bf16.msra.mxu0 %v308
    %422 = vmatprep.subr.bf16.mxu0 %v305
    %423 = vmatpush1.bf16.msra.mxu0 %v304
    %424 = vmatprep.subr.bf16.mxu0 %v301
    %425 = vmatpush1.bf16.msra.mxu0 %v300
    %426 = vmatprep.subr.bf16.mxu0 %v297
    %427 = vmatpush1.bf16.msra.mxu0 %v296
    %428 = vmatprep.subr.bf16.mxu0 %v293
    %429 = vmatpush1.bf16.msra.mxu0 %v292
    %430 = vmatprep.subr.bf16.mxu0 %v289
    %431 = vmatpush1.bf16.msra.mxu0 %v288
    %432 = vmatprep.subr.bf16.mxu0 %v349
    %433 = vmatpush2.bf16.msra.mxu0 %v348
    %434 = vmatprep.subr.bf16.mxu0 %v345
    %435 = vmatpush2.bf16.msra.mxu0 %v344
    %436 = vmatprep.subr.bf16.mxu0 %v341
    %437 = vmatpush2.bf16.msra.mxu0 %v340
    %438 = vmatprep.subr.bf16.mxu0 %v337
    %439 = vmatpush2.bf16.msra.mxu0 %v336
    %440 = vmatprep.subr.bf16.mxu0 %v333
    %441 = vmatpush2.bf16.msra.mxu0 %v332
    %442 = vmatprep.subr.bf16.mxu0 %v329
    %443 = vmatpush2.bf16.msra.mxu0 %v328
    %444 = vmatprep.subr.bf16.mxu0 %v325
    %445 = vmatpush2.bf16.msra.mxu0 %v324
    %446 = vmatprep.subr.bf16.mxu0 %v321
    %447 = vmatpush2.bf16.msra.mxu0 %v320
    %448 = vmatprep.mubr.bf16.mxu0 %v25
    %449 = vmatmul.mubr.bf16.gmra.mxu0 %v24
    %v450 = vpop.f32.mrf.mxu0
    %v451 = vadd.f32 0.0, %v450
    %v452 = vpop.f32.mrf.mxu0
    %v453 = vadd.f32 0.0, %v452
    %v454 = vpop.f32.mrf.mxu0
    %v455 = vpop.f32.mrf.mxu0
    %456 = vdwg.mxu0
    %457 = vmatprep.subr.bf16.mxu0 %v319
    %458 = vmatpush1.bf16.msra.mxu0 %v318
    %459 = vmatprep.subr.bf16.mxu0 %v315
    %460 = vmatpush1.bf16.msra.mxu0 %v314
    %461 = vmatprep.subr.bf16.mxu0 %v311
    %462 = vmatpush1.bf16.msra.mxu0 %v310
    %463 = vmatprep.subr.bf16.mxu0 %v307
    %464 = vmatpush1.bf16.msra.mxu0 %v306
    %465 = vmatprep.subr.bf16.mxu0 %v303
    %466 = vmatpush1.bf16.msra.mxu0 %v302
    %467 = vmatprep.subr.bf16.mxu0 %v299
    %468 = vmatpush1.bf16.msra.mxu0 %v298
    %469 = vmatprep.subr.bf16.mxu0 %v295
    %470 = vmatpush1.bf16.msra.mxu0 %v294
    %471 = vmatprep.subr.bf16.mxu0 %v291
    %472 = vmatpush1.bf16.msra.mxu0 %v290
    %473 = vmatprep.subr.bf16.mxu0 %v351
    %474 = vmatpush2.bf16.msra.mxu0 %v350
    %475 = vmatprep.subr.bf16.mxu0 %v347
    %476 = vmatpush2.bf16.msra.mxu0 %v346
    %477 = vmatprep.subr.bf16.mxu0 %v343
    %478 = vmatpush2.bf16.msra.mxu0 %v342
    %479 = vmatprep.subr.bf16.mxu0 %v339
    %480 = vmatpush2.bf16.msra.mxu0 %v338
    %481 = vmatprep.subr.bf16.mxu0 %v335
    %482 = vmatpush2.bf16.msra.mxu0 %v334
    %483 = vmatprep.subr.bf16.mxu0 %v331
    %484 = vmatpush2.bf16.msra.mxu0 %v330
    %485 = vmatprep.subr.bf16.mxu0 %v327
    %486 = vmatpush2.bf16.msra.mxu0 %v326
    %487 = vmatprep.subr.bf16.mxu0 %v323
    %488 = vmatpush2.bf16.msra.mxu0 %v322
    %489 = vmatprep.mubr.bf16.mxu0 %v25
    %490 = vmatmul.mubr.bf16.gmra.mxu0 %v24
    %v491 = vpop.f32.mrf.mxu0
    %v492 = vadd.f32 0.0, %v491
    %v493 = vpop.f32.mrf.mxu0
    %v494 = vadd.f32 0.0, %v493
    %v495 = vpop.f32.mrf.mxu0
    %v496 = vpop.f32.mrf.mxu0
    %497 = vdwg.mxu0
    %v498 = vld [vmem:[%s3] sm:$0xff]
    %v499 = vld [vmem:[%s3 + $0x8] sm:$0xff]
    %v500 = vld [vmem:[%s3 + $0x10] sm:$0xff]
    %v501 = vld [vmem:[%s3 + $0x18] sm:$0xff]
    %v502 = vld [vmem:[%s3 + $0x20] sm:$0xff]
    %v503 = vld [vmem:[%s3 + $0x28] sm:$0xff]
    %v504 = vld [vmem:[%s3 + $0x30] sm:$0xff]
    %v505 = vld [vmem:[%s3 + $0x38] sm:$0xff]
    %v506 = vld [vmem:[%s3 + $0x40] sm:$0xff]
    %v507 = vld [vmem:[%s3 + $0x48] sm:$0xff]
    %v508 = vld [vmem:[%s3 + $0x50] sm:$0xff]
    %v509 = vld [vmem:[%s3 + $0x58] sm:$0xff]
    %v510 = vld [vmem:[%s3 + $0x60] sm:$0xff]
    %v511 = vld [vmem:[%s3 + $0x68] sm:$0xff]
    %v512 = vld [vmem:[%s3 + $0x70] sm:$0xff]
    %v513 = vld [vmem:[%s3 + $0x78] sm:$0xff]
    %v514 = vld [vmem:[%s3 + $0x80] sm:$0xff]
    %v515 = vld [vmem:[%s3 + $0x88] sm:$0xff]
    %v516 = vld [vmem:[%s3 + $0x90] sm:$0xff]
    %v517 = vld [vmem:[%s3 + $0x98] sm:$0xff]
    %v518 = vld [vmem:[%s3 + $0xa0] sm:$0xff]
    %v519 = vld [vmem:[%s3 + $0xa8] sm:$0xff]
    %v520 = vld [vmem:[%s3 + $0xb0] sm:$0xff]
    %v521 = vld [vmem:[%s3 + $0xb8] sm:$0xff]
    %v522 = vld [vmem:[%s3 + $0xc0] sm:$0xff]
    %v523 = vld [vmem:[%s3 + $0xc8] sm:$0xff]
    %v524 = vld [vmem:[%s3 + $0xd0] sm:$0xff]
    %v525 = vld [vmem:[%s3 + $0xd8] sm:$0xff]
    %v526 = vld [vmem:[%s3 + $0xe0] sm:$0xff]
    %v527 = vld [vmem:[%s3 + $0xe8] sm:$0xff]
    %v528 = vld [vmem:[%s3 + $0xf0] sm:$0xff]
    %v529 = vld [vmem:[%s3 + $0xf8] sm:$0xff]
    %v530 = vld [vmem:[%s3 + $0x100] sm:$0xff]
    %v531 = vld [vmem:[%s3 + $0x108] sm:$0xff]
    %v532 = vld [vmem:[%s3 + $0x110] sm:$0xff]
    %v533 = vld [vmem:[%s3 + $0x118] sm:$0xff]
    %v534 = vld [vmem:[%s3 + $0x120] sm:$0xff]
    %v535 = vld [vmem:[%s3 + $0x128] sm:$0xff]
    %v536 = vld [vmem:[%s3 + $0x130] sm:$0xff]
    %v537 = vld [vmem:[%s3 + $0x138] sm:$0xff]
    %v538 = vld [vmem:[%s3 + $0x140] sm:$0xff]
    %v539 = vld [vmem:[%s3 + $0x148] sm:$0xff]
    %v540 = vld [vmem:[%s3 + $0x150] sm:$0xff]
    %v541 = vld [vmem:[%s3 + $0x158] sm:$0xff]
    %v542 = vld [vmem:[%s3 + $0x160] sm:$0xff]
    %v543 = vld [vmem:[%s3 + $0x168] sm:$0xff]
    %v544 = vld [vmem:[%s3 + $0x170] sm:$0xff]
    %v545 = vld [vmem:[%s3 + $0x178] sm:$0xff]
    %v546 = vld [vmem:[%s3 + $0x180] sm:$0xff]
    %v547 = vld [vmem:[%s3 + $0x188] sm:$0xff]
    %v548 = vld [vmem:[%s3 + $0x190] sm:$0xff]
    %v549 = vld [vmem:[%s3 + $0x198] sm:$0xff]
    %v550 = vld [vmem:[%s3 + $0x1a0] sm:$0xff]
    %v551 = vld [vmem:[%s3 + $0x1a8] sm:$0xff]
    %v552 = vld [vmem:[%s3 + $0x1b0] sm:$0xff]
    %v553 = vld [vmem:[%s3 + $0x1b8] sm:$0xff]
    %v554 = vld [vmem:[%s3 + $0x1c0] sm:$0xff]
    %v555 = vld [vmem:[%s3 + $0x1c8] sm:$0xff]
    %v556 = vld [vmem:[%s3 + $0x1d0] sm:$0xff]
    %v557 = vld [vmem:[%s3 + $0x1d8] sm:$0xff]
    %v558 = vld [vmem:[%s3 + $0x1e0] sm:$0xff]
    %v559 = vld [vmem:[%s3 + $0x1e8] sm:$0xff]
    %v560 = vld [vmem:[%s3 + $0x1f0] sm:$0xff]
    %v561 = vld [vmem:[%s3 + $0x1f8] sm:$0xff]
    %v562 = vld [vmem:[%s3 + $0x200] sm:$0xff]
    %v563 = vld [vmem:[%s3 + $0x208] sm:$0xff]
    %v564 = vld [vmem:[%s3 + $0x210] sm:$0xff]
    %v565 = vld [vmem:[%s3 + $0x218] sm:$0xff]
    %v566 = vld [vmem:[%s3 + $0x220] sm:$0xff]
    %v567 = vld [vmem:[%s3 + $0x228] sm:$0xff]
    %v568 = vld [vmem:[%s3 + $0x230] sm:$0xff]
    %v569 = vld [vmem:[%s3 + $0x238] sm:$0xff]
    %v570 = vld [vmem:[%s3 + $0x240] sm:$0xff]
    %v571 = vld [vmem:[%s3 + $0x248] sm:$0xff]
    %v572 = vld [vmem:[%s3 + $0x250] sm:$0xff]
    %v573 = vld [vmem:[%s3 + $0x258] sm:$0xff]
    %v574 = vld [vmem:[%s3 + $0x260] sm:$0xff]
    %v575 = vld [vmem:[%s3 + $0x268] sm:$0xff]
    %v576 = vld [vmem:[%s3 + $0x270] sm:$0xff]
    %v577 = vld [vmem:[%s3 + $0x278] sm:$0xff]
    %v578 = vld [vmem:[%s3 + $0x280] sm:$0xff]
    %v579 = vld [vmem:[%s3 + $0x288] sm:$0xff]
    %v580 = vld [vmem:[%s3 + $0x290] sm:$0xff]
    %v581 = vld [vmem:[%s3 + $0x298] sm:$0xff]
    %v582 = vld [vmem:[%s3 + $0x2a0] sm:$0xff]
    %v583 = vld [vmem:[%s3 + $0x2a8] sm:$0xff]
    %v584 = vld [vmem:[%s3 + $0x2b0] sm:$0xff]
    %v585 = vld [vmem:[%s3 + $0x2b8] sm:$0xff]
    %v586 = vld [vmem:[%s3 + $0x2c0] sm:$0xff]
    %v587 = vld [vmem:[%s3 + $0x2c8] sm:$0xff]
    %v588 = vld [vmem:[%s3 + $0x2d0] sm:$0xff]
    %v589 = vld [vmem:[%s3 + $0x2d8] sm:$0xff]
    %v590 = vld [vmem:[%s3 + $0x2e0] sm:$0xff]
    %v591 = vld [vmem:[%s3 + $0x2e8] sm:$0xff]
    %v592 = vld [vmem:[%s3 + $0x2f0] sm:$0xff]
    %v593 = vld [vmem:[%s3 + $0x2f8] sm:$0xff]
    %v690 = vunpack.c.l.b16 %v498
    %v691 = vunpack.c.h.b16 %v498
    %v692 = vunpack.c.l.b16 %v499
    %v693 = vunpack.c.h.b16 %v499
    %v694 = vunpack.c.l.b16 %v500
    %v695 = vunpack.c.h.b16 %v500
    %v696 = vunpack.c.l.b16 %v501
    %v697 = vunpack.c.h.b16 %v501
    %v698 = vunpack.c.l.b16 %v502
    %v699 = vunpack.c.h.b16 %v502
    %v700 = vunpack.c.l.b16 %v503
    %v701 = vunpack.c.h.b16 %v503
    %v702 = vunpack.c.l.b16 %v504
    %v703 = vunpack.c.h.b16 %v504
    %v704 = vunpack.c.l.b16 %v505
    %v705 = vunpack.c.h.b16 %v505
    %v706 = vunpack.c.l.b16 %v506
    %v707 = vunpack.c.h.b16 %v506
    %v708 = vunpack.c.l.b16 %v507
    %v709 = vunpack.c.h.b16 %v507
    %v710 = vunpack.c.l.b16 %v508
    %v711 = vunpack.c.h.b16 %v508
    %v712 = vunpack.c.l.b16 %v509
    %v713 = vunpack.c.h.b16 %v509
    %v714 = vunpack.c.l.b16 %v510
    %v715 = vunpack.c.h.b16 %v510
    %v716 = vunpack.c.l.b16 %v511
    %v717 = vunpack.c.h.b16 %v511
    %v718 = vunpack.c.l.b16 %v512
    %v719 = vunpack.c.h.b16 %v512
    %v720 = vunpack.c.l.b16 %v513
    %v721 = vunpack.c.h.b16 %v513
    %v722 = vunpack.c.l.b16 %v514
    %v723 = vunpack.c.h.b16 %v514
    %v724 = vunpack.c.l.b16 %v515
    %v725 = vunpack.c.h.b16 %v515
    %v726 = vunpack.c.l.b16 %v516
    %v727 = vunpack.c.h.b16 %v516
    %v728 = vunpack.c.l.b16 %v517
    %v729 = vunpack.c.h.b16 %v517
    %v730 = vunpack.c.l.b16 %v518
    %v731 = vunpack.c.h.b16 %v518
    %v732 = vunpack.c.l.b16 %v519
    %v733 = vunpack.c.h.b16 %v519
    %v734 = vunpack.c.l.b16 %v520
    %v735 = vunpack.c.h.b16 %v520
    %v736 = vunpack.c.l.b16 %v521
    %v737 = vunpack.c.h.b16 %v521
    %v738 = vunpack.c.l.b16 %v522
    %v739 = vunpack.c.h.b16 %v522
    %v740 = vunpack.c.l.b16 %v523
    %v741 = vunpack.c.h.b16 %v523
    %v742 = vunpack.c.l.b16 %v524
    %v743 = vunpack.c.h.b16 %v524
    %v744 = vunpack.c.l.b16 %v525
    %v745 = vunpack.c.h.b16 %v525
    %v746 = vunpack.c.l.b16 %v526
    %v747 = vunpack.c.h.b16 %v526
    %v748 = vunpack.c.l.b16 %v527
    %v749 = vunpack.c.h.b16 %v527
    %v750 = vunpack.c.l.b16 %v528
    %v751 = vunpack.c.h.b16 %v528
    %v752 = vunpack.c.l.b16 %v529
    %v753 = vunpack.c.h.b16 %v529
    %v754 = vunpack.c.l.b16 %v530
    %v755 = vunpack.c.h.b16 %v530
    %v756 = vunpack.c.l.b16 %v531
    %v757 = vunpack.c.h.b16 %v531
    %v758 = vunpack.c.l.b16 %v532
    %v759 = vunpack.c.h.b16 %v532
    %v760 = vunpack.c.l.b16 %v533
    %v761 = vunpack.c.h.b16 %v533
    %v762 = vunpack.c.l.b16 %v534
    %v763 = vunpack.c.h.b16 %v534
    %v764 = vunpack.c.l.b16 %v535
    %v765 = vunpack.c.h.b16 %v535
    %v766 = vunpack.c.l.b16 %v536
    %v767 = vunpack.c.h.b16 %v536
    %v768 = vunpack.c.l.b16 %v537
    %v769 = vunpack.c.h.b16 %v537
    %v770 = vunpack.c.l.b16 %v538
    %v771 = vunpack.c.h.b16 %v538
    %v772 = vunpack.c.l.b16 %v539
    %v773 = vunpack.c.h.b16 %v539
    %v774 = vunpack.c.l.b16 %v540
    %v775 = vunpack.c.h.b16 %v540
    %v776 = vunpack.c.l.b16 %v541
    %v777 = vunpack.c.h.b16 %v541
    %v778 = vunpack.c.l.b16 %v542
    %v779 = vunpack.c.h.b16 %v542
    %v780 = vunpack.c.l.b16 %v543
    %v781 = vunpack.c.h.b16 %v543
    %v782 = vunpack.c.l.b16 %v544
    %v783 = vunpack.c.h.b16 %v544
    %v784 = vunpack.c.l.b16 %v545
    %v785 = vunpack.c.h.b16 %v545
    %v786 = vunpack.c.l.b16 %v546
    %v787 = vunpack.c.h.b16 %v546
    %v788 = vunpack.c.l.b16 %v547
    %v789 = vunpack.c.h.b16 %v547
    %v790 = vunpack.c.l.b16 %v548
    %v791 = vunpack.c.h.b16 %v548
    %v792 = vunpack.c.l.b16 %v549
    %v793 = vunpack.c.h.b16 %v549
    %v794 = vunpack.c.l.b16 %v550
    %v795 = vunpack.c.h.b16 %v550
    %v796 = vunpack.c.l.b16 %v551
    %v797 = vunpack.c.h.b16 %v551
    %v798 = vunpack.c.l.b16 %v552
    %v799 = vunpack.c.h.b16 %v552
    %v800 = vunpack.c.l.b16 %v553
    %v801 = vunpack.c.h.b16 %v553
    %v802 = vunpack.c.l.b16 %v554
    %v803 = vunpack.c.h.b16 %v554
    %v804 = vunpack.c.l.b16 %v555
    %v805 = vunpack.c.h.b16 %v555
    %v806 = vunpack.c.l.b16 %v556
    %v807 = vunpack.c.h.b16 %v556
    %v808 = vunpack.c.l.b16 %v557
    %v809 = vunpack.c.h.b16 %v557
    %v810 = vunpack.c.l.b16 %v558
    %v811 = vunpack.c.h.b16 %v558
    %v812 = vunpack.c.l.b16 %v559
    %v813 = vunpack.c.h.b16 %v559
    %v814 = vunpack.c.l.b16 %v560
    %v815 = vunpack.c.h.b16 %v560
    %v816 = vunpack.c.l.b16 %v561
    %v817 = vunpack.c.h.b16 %v561
    %v818 = vunpack.c.l.b16 %v562
    %v819 = vunpack.c.h.b16 %v562
    %v820 = vunpack.c.l.b16 %v563
    %v821 = vunpack.c.h.b16 %v563
    %v822 = vunpack.c.l.b16 %v564
    %v823 = vunpack.c.h.b16 %v564
    %v824 = vunpack.c.l.b16 %v565
    %v825 = vunpack.c.h.b16 %v565
    %v826 = vunpack.c.l.b16 %v566
    %v827 = vunpack.c.h.b16 %v566
    %v828 = vunpack.c.l.b16 %v567
    %v829 = vunpack.c.h.b16 %v567
    %v830 = vunpack.c.l.b16 %v568
    %v831 = vunpack.c.h.b16 %v568
    %v832 = vunpack.c.l.b16 %v569
    %v833 = vunpack.c.h.b16 %v569
    %v834 = vunpack.c.l.b16 %v570
    %v835 = vunpack.c.h.b16 %v570
    %v836 = vunpack.c.l.b16 %v571
    %v837 = vunpack.c.h.b16 %v571
    %v838 = vunpack.c.l.b16 %v572
    %v839 = vunpack.c.h.b16 %v572
    %v840 = vunpack.c.l.b16 %v573
    %v841 = vunpack.c.h.b16 %v573
    %v842 = vunpack.c.l.b16 %v574
    %v843 = vunpack.c.h.b16 %v574
    %v844 = vunpack.c.l.b16 %v575
    %v845 = vunpack.c.h.b16 %v575
    %v846 = vunpack.c.l.b16 %v576
    %v847 = vunpack.c.h.b16 %v576
    %v848 = vunpack.c.l.b16 %v577
    %v849 = vunpack.c.h.b16 %v577
    %v850 = vunpack.c.l.b16 %v578
    %v851 = vunpack.c.h.b16 %v578
    %v852 = vunpack.c.l.b16 %v579
    %v853 = vunpack.c.h.b16 %v579
    %v854 = vunpack.c.l.b16 %v580
    %v855 = vunpack.c.h.b16 %v580
    %v856 = vunpack.c.l.b16 %v581
    %v857 = vunpack.c.h.b16 %v581
    %v858 = vunpack.c.l.b16 %v582
    %v859 = vunpack.c.h.b16 %v582
    %v860 = vunpack.c.l.b16 %v583
    %v861 = vunpack.c.h.b16 %v583
    %v862 = vunpack.c.l.b16 %v584
    %v863 = vunpack.c.h.b16 %v584
    %v864 = vunpack.c.l.b16 %v585
    %v865 = vunpack.c.h.b16 %v585
    %v866 = vunpack.c.l.b16 %v586
    %v867 = vunpack.c.h.b16 %v586
    %v868 = vunpack.c.l.b16 %v587
    %v869 = vunpack.c.h.b16 %v587
    %v870 = vunpack.c.l.b16 %v588
    %v871 = vunpack.c.h.b16 %v588
    %v872 = vunpack.c.l.b16 %v589
    %v873 = vunpack.c.h.b16 %v589
    %v874 = vunpack.c.l.b16 %v590
    %v875 = vunpack.c.h.b16 %v590
    %v876 = vunpack.c.l.b16 %v591
    %v877 = vunpack.c.h.b16 %v591
    %v878 = vunpack.c.l.b16 %v592
    %v879 = vunpack.c.h.b16 %v592
    %v880 = vunpack.c.l.b16 %v593
    %v881 = vunpack.c.h.b16 %v593
    %v882 = vpack.c.b16 %v694, %v690
    %v883 = vpack.c.b16 %v695, %v691
    %v884 = vpack.c.b16 %v696, %v692
    %v885 = vpack.c.b16 %v697, %v693
    %v886 = vpack.c.b16 %v702, %v698
    %v887 = vpack.c.b16 %v703, %v699
    %v888 = vpack.c.b16 %v704, %v700
    %v889 = vpack.c.b16 %v705, %v701
    %v890 = vpack.c.b16 %v710, %v706
    %v891 = vpack.c.b16 %v711, %v707
    %v892 = vpack.c.b16 %v712, %v708
    %v893 = vpack.c.b16 %v713, %v709
    %v894 = vpack.c.b16 %v718, %v714
    %v895 = vpack.c.b16 %v719, %v715
    %v896 = vpack.c.b16 %v720, %v716
    %v897 = vpack.c.b16 %v721, %v717
    %v898 = vpack.c.b16 %v726, %v722
    %v899 = vpack.c.b16 %v727, %v723
    %v900 = vpack.c.b16 %v728, %v724
    %v901 = vpack.c.b16 %v729, %v725
    %v902 = vpack.c.b16 %v734, %v730
    %v903 = vpack.c.b16 %v735, %v731
    %v904 = vpack.c.b16 %v736, %v732
    %v905 = vpack.c.b16 %v737, %v733
    %v906 = vpack.c.b16 %v742, %v738
    %v907 = vpack.c.b16 %v743, %v739
    %v908 = vpack.c.b16 %v744, %v740
    %v909 = vpack.c.b16 %v745, %v741
    %v910 = vpack.c.b16 %v750, %v746
    %v911 = vpack.c.b16 %v751, %v747
    %v912 = vpack.c.b16 %v752, %v748
    %v913 = vpack.c.b16 %v753, %v749
    %v914 = vpack.c.b16 %v758, %v754
    %v915 = vpack.c.b16 %v759, %v755
    %v916 = vpack.c.b16 %v760, %v756
    %v917 = vpack.c.b16 %v761, %v757
    %v918 = vpack.c.b16 %v766, %v762
    %v919 = vpack.c.b16 %v767, %v763
    %v920 = vpack.c.b16 %v768, %v764
    %v921 = vpack.c.b16 %v769, %v765
    %v922 = vpack.c.b16 %v774, %v770
    %v923 = vpack.c.b16 %v775, %v771
    %v924 = vpack.c.b16 %v776, %v772
    %v925 = vpack.c.b16 %v777, %v773
    %v926 = vpack.c.b16 %v782, %v778
    %v927 = vpack.c.b16 %v783, %v779
    %v928 = vpack.c.b16 %v784, %v780
    %v929 = vpack.c.b16 %v785, %v781
    %v930 = vpack.c.b16 %v790, %v786
    %v931 = vpack.c.b16 %v791, %v787
    %v932 = vpack.c.b16 %v792, %v788
    %v933 = vpack.c.b16 %v793, %v789
    %v934 = vpack.c.b16 %v798, %v794
    %v935 = vpack.c.b16 %v799, %v795
    %v936 = vpack.c.b16 %v800, %v796
    %v937 = vpack.c.b16 %v801, %v797
    %v938 = vpack.c.b16 %v806, %v802
    %v939 = vpack.c.b16 %v807, %v803
    %v940 = vpack.c.b16 %v808, %v804
    %v941 = vpack.c.b16 %v809, %v805
    %v942 = vpack.c.b16 %v814, %v810
    %v943 = vpack.c.b16 %v815, %v811
    %v944 = vpack.c.b16 %v816, %v812
    %v945 = vpack.c.b16 %v817, %v813
    %v946 = vpack.c.b16 %v822, %v818
    %v947 = vpack.c.b16 %v823, %v819
    %v948 = vpack.c.b16 %v824, %v820
    %v949 = vpack.c.b16 %v825, %v821
    %v950 = vpack.c.b16 %v830, %v826
    %v951 = vpack.c.b16 %v831, %v827
    %v952 = vpack.c.b16 %v832, %v828
    %v953 = vpack.c.b16 %v833, %v829
    %v954 = vpack.c.b16 %v838, %v834
    %v955 = vpack.c.b16 %v839, %v835
    %v956 = vpack.c.b16 %v840, %v836
    %v957 = vpack.c.b16 %v841, %v837
    %v958 = vpack.c.b16 %v846, %v842
    %v959 = vpack.c.b16 %v847, %v843
    %v960 = vpack.c.b16 %v848, %v844
    %v961 = vpack.c.b16 %v849, %v845
    %v962 = vpack.c.b16 %v854, %v850
    %v963 = vpack.c.b16 %v855, %v851
    %v964 = vpack.c.b16 %v856, %v852
    %v965 = vpack.c.b16 %v857, %v853
    %v966 = vpack.c.b16 %v862, %v858
    %v967 = vpack.c.b16 %v863, %v859
    %v968 = vpack.c.b16 %v864, %v860
    %v969 = vpack.c.b16 %v865, %v861
    %v970 = vpack.c.b16 %v870, %v866
    %v971 = vpack.c.b16 %v871, %v867
    %v972 = vpack.c.b16 %v872, %v868
    %v973 = vpack.c.b16 %v873, %v869
    %v974 = vpack.c.b16 %v878, %v874
    %v975 = vpack.c.b16 %v879, %v875
    %v976 = vpack.c.b16 %v880, %v876
    %v977 = vpack.c.b16 %v881, %v877
    %1074 = vmatprep.subr.bf16.mxu0 %v911
    %1075 = vmatpush1.bf16.msra.mxu0 %v910
    %1076 = vmatprep.subr.bf16.mxu0 %v907
    %1077 = vmatpush1.bf16.msra.mxu0 %v906
    %1078 = vmatprep.subr.bf16.mxu0 %v903
    %1079 = vmatpush1.bf16.msra.mxu0 %v902
    %1080 = vmatprep.subr.bf16.mxu0 %v899
    %1081 = vmatpush1.bf16.msra.mxu0 %v898
    %1082 = vmatprep.subr.bf16.mxu0 %v895
    %1083 = vmatpush1.bf16.msra.mxu0 %v894
    %1084 = vmatprep.subr.bf16.mxu0 %v891
    %1085 = vmatpush1.bf16.msra.mxu0 %v890
    %1086 = vmatprep.subr.bf16.mxu0 %v887
    %1087 = vmatpush1.bf16.msra.mxu0 %v886
    %1088 = vmatprep.subr.bf16.mxu0 %v883
    %1089 = vmatpush1.bf16.msra.mxu0 %v882
    %1090 = vmatprep.subr.bf16.mxu0 %v943
    %1091 = vmatpush2.bf16.msra.mxu0 %v942
    %1092 = vmatprep.subr.bf16.mxu0 %v939
    %1093 = vmatpush2.bf16.msra.mxu0 %v938
    %1094 = vmatprep.subr.bf16.mxu0 %v935
    %1095 = vmatpush2.bf16.msra.mxu0 %v934
    %1096 = vmatprep.subr.bf16.mxu0 %v931
    %1097 = vmatpush2.bf16.msra.mxu0 %v930
    %1098 = vmatprep.subr.bf16.mxu0 %v927
    %1099 = vmatpush2.bf16.msra.mxu0 %v926
    %1100 = vmatprep.subr.bf16.mxu0 %v923
    %1101 = vmatpush2.bf16.msra.mxu0 %v922
    %1102 = vmatprep.subr.bf16.mxu0 %v919
    %1103 = vmatpush2.bf16.msra.mxu0 %v918
    %1104 = vmatprep.subr.bf16.mxu0 %v915
    %1105 = vmatpush2.bf16.msra.mxu0 %v914
    %1106 = vmatprep.mubr.bf16.mxu0 %v30
    %1107 = vmatmul.mubr.bf16.gmra.mxu0 %v29
    %v1108 = vpop.f32.mrf.mxu0
    %v1109 = vadd.f32 0.0, %v1108
    %v1110 = vpop.f32.mrf.mxu0
    %v1111 = vadd.f32 0.0, %v1110
    %v1112 = vpop.f32.mrf.mxu0
    %v1113 = vpop.f32.mrf.mxu0
    %1114 = vdwg.mxu0
    %1115 = vmatprep.subr.bf16.mxu0 %v975
    %1116 = vmatpush1.bf16.msra.mxu0 %v974
    %1117 = vmatprep.subr.bf16.mxu0 %v971
    %1118 = vmatpush1.bf16.msra.mxu0 %v970
    %1119 = vmatprep.subr.bf16.mxu0 %v967
    %1120 = vmatpush1.bf16.msra.mxu0 %v966
    %1121 = vmatprep.subr.bf16.mxu0 %v963
    %1122 = vmatpush1.bf16.msra.mxu0 %v962
    %1123 = vmatprep.subr.bf16.mxu0 %v959
    %1124 = vmatpush1.bf16.msra.mxu0 %v958
    %1125 = vmatprep.subr.bf16.mxu0 %v955
    %1126 = vmatpush1.bf16.msra.mxu0 %v954
    %1127 = vmatprep.subr.bf16.mxu0 %v951
    %1128 = vmatpush1.bf16.msra.mxu0 %v950
    %1129 = vmatprep.subr.bf16.mxu0 %v947
    %1130 = vmatpush1.bf16.msra.mxu0 %v946
    %1131 = vmatprep.subr.bf16.mxu0 0
    %1132 = vmatpush2.bf16.msra.mxu0 0
    %1133 = vmatprep.subr.bf16.mxu0 0
    %1134 = vmatpush2.bf16.msra.mxu0 0
    %1135 = vmatprep.subr.bf16.mxu0 0
    %1136 = vmatpush2.bf16.msra.mxu0 0
    %1137 = vmatprep.subr.bf16.mxu0 0
    %1138 = vmatpush2.bf16.msra.mxu0 0
    %1139 = vmatprep.subr.bf16.mxu0 0
    %1140 = vmatpush2.bf16.msra.mxu0 0
    %1141 = vmatprep.subr.bf16.mxu0 0
    %1142 = vmatpush2.bf16.msra.mxu0 0
    %1143 = vmatprep.subr.bf16.mxu0 0
    %1144 = vmatpush2.bf16.msra.mxu0 0
    %1145 = vmatprep.subr.bf16.mxu0 0
    %1146 = vmatpush2.bf16.msra.mxu0 0
    %1147 = vmatprep.mubr.bf16.mxu0 0
    %1148 = vmatmul.mubr.bf16.gmra.mxu0 %v31
    %v1149 = vpop.f32.mrf.mxu0
    %v1150 = vadd.f32 %v1109, %v1149
    %v1151 = vpop.f32.mrf.mxu0
    %v1152 = vadd.f32 %v1111, %v1151
    %v1153 = vpop.f32.mrf.mxu0
    %v1154 = vpop.f32.mrf.mxu0
    %1155 = vdwg.mxu0
    %1156 = vmatprep.subr.bf16.mxu0 %v913
    %1157 = vmatpush1.bf16.msra.mxu0 %v912
    %1158 = vmatprep.subr.bf16.mxu0 %v909
    %1159 = vmatpush1.bf16.msra.mxu0 %v908
    %1160 = vmatprep.subr.bf16.mxu0 %v905
    %1161 = vmatpush1.bf16.msra.mxu0 %v904
    %1162 = vmatprep.subr.bf16.mxu0 %v901
    %1163 = vmatpush1.bf16.msra.mxu0 %v900
    %1164 = vmatprep.subr.bf16.mxu0 %v897
    %1165 = vmatpush1.bf16.msra.mxu0 %v896
    %1166 = vmatprep.subr.bf16.mxu0 %v893
    %1167 = vmatpush1.bf16.msra.mxu0 %v892
    %1168 = vmatprep.subr.bf16.mxu0 %v889
    %1169 = vmatpush1.bf16.msra.mxu0 %v888
    %1170 = vmatprep.subr.bf16.mxu0 %v885
    %1171 = vmatpush1.bf16.msra.mxu0 %v884
    %1172 = vmatprep.subr.bf16.mxu0 %v945
    %1173 = vmatpush2.bf16.msra.mxu0 %v944
    %1174 = vmatprep.subr.bf16.mxu0 %v941
    %1175 = vmatpush2.bf16.msra.mxu0 %v940
    %1176 = vmatprep.subr.bf16.mxu0 %v937
    %1177 = vmatpush2.bf16.msra.mxu0 %v936
    %1178 = vmatprep.subr.bf16.mxu0 %v933
    %1179 = vmatpush2.bf16.msra.mxu0 %v932
    %1180 = vmatprep.subr.bf16.mxu0 %v929
    %1181 = vmatpush2.bf16.msra.mxu0 %v928
    %1182 = vmatprep.subr.bf16.mxu0 %v925
    %1183 = vmatpush2.bf16.msra.mxu0 %v924
    %1184 = vmatprep.subr.bf16.mxu0 %v921
    %1185 = vmatpush2.bf16.msra.mxu0 %v920
    %1186 = vmatprep.subr.bf16.mxu0 %v917
    %1187 = vmatpush2.bf16.msra.mxu0 %v916
    %1188 = vmatprep.mubr.bf16.mxu0 %v30
    %1189 = vmatmul.mubr.bf16.gmra.mxu0 %v29
    %v1190 = vpop.f32.mrf.mxu0
    %v1191 = vadd.f32 0.0, %v1190
    %v1192 = vpop.f32.mrf.mxu0
    %v1193 = vadd.f32 0.0, %v1192
    %v1194 = vpop.f32.mrf.mxu0
    %v1195 = vpop.f32.mrf.mxu0
    %1196 = vdwg.mxu0
    %1197 = vmatprep.subr.bf16.mxu0 %v977
    %1198 = vmatpush1.bf16.msra.mxu0 %v976
    %1199 = vmatprep.subr.bf16.mxu0 %v973
    %1200 = vmatpush1.bf16.msra.mxu0 %v972
    %1201 = vmatprep.subr.bf16.mxu0 %v969
    %1202 = vmatpush1.bf16.msra.mxu0 %v968
    %1203 = vmatprep.subr.bf16.mxu0 %v965
    %1204 = vmatpush1.bf16.msra.mxu0 %v964
    %1205 = vmatprep.subr.bf16.mxu0 %v961
    %1206 = vmatpush1.bf16.msra.mxu0 %v960
    %1207 = vmatprep.subr.bf16.mxu0 %v957
    %1208 = vmatpush1.bf16.msra.mxu0 %v956
    %1209 = vmatprep.subr.bf16.mxu0 %v953
    %1210 = vmatpush1.bf16.msra.mxu0 %v952
    %1211 = vmatprep.subr.bf16.mxu0 %v949
    %1212 = vmatpush1.bf16.msra.mxu0 %v948
    %1213 = vmatprep.subr.bf16.mxu0 0
    %1214 = vmatpush2.bf16.msra.mxu0 0
    %1215 = vmatprep.subr.bf16.mxu0 0
    %1216 = vmatpush2.bf16.msra.mxu0 0
    %1217 = vmatprep.subr.bf16.mxu0 0
    %1218 = vmatpush2.bf16.msra.mxu0 0
    %1219 = vmatprep.subr.bf16.mxu0 0
    %1220 = vmatpush2.bf16.msra.mxu0 0
    %1221 = vmatprep.subr.bf16.mxu0 0
    %1222 = vmatpush2.bf16.msra.mxu0 0
    %1223 = vmatprep.subr.bf16.mxu0 0
    %1224 = vmatpush2.bf16.msra.mxu0 0
    %1225 = vmatprep.subr.bf16.mxu0 0
    %1226 = vmatpush2.bf16.msra.mxu0 0
    %1227 = vmatprep.subr.bf16.mxu0 0
    %1228 = vmatpush2.bf16.msra.mxu0 0
    %1229 = vmatprep.mubr.bf16.mxu0 0
    %1230 = vmatmul.mubr.bf16.gmra.mxu0 %v31
    %v1231 = vpop.f32.mrf.mxu0
    %v1232 = vadd.f32 %v1191, %v1231
    %v1233 = vpop.f32.mrf.mxu0
    %v1234 = vadd.f32 %v1193, %v1233
    %v1235 = vpop.f32.mrf.mxu0
    %v1236 = vpop.f32.mrf.mxu0
    %1237 = vdwg.mxu0
    %v1238 = vld [vmem:[%s4] ss:$8 sm:$0x3]
    %s1239 = scalar_lea.vmem %s4, 1
    %v1240 = vld [vmem:[%s1239] ss:$8 sm:$0x3]
    %s1241 = scalar_lea.vmem %s4, 2
    %v1242 = vld [vmem:[%s1241] ss:$8 sm:$0x3]
    %s1243 = scalar_lea.vmem %s4, 3
    %v1244 = vld [vmem:[%s1243] ss:$8 sm:$0x3]
    %s1245 = scalar_lea.vmem %s4, 4
    %v1246 = vld [vmem:[%s1245] ss:$8 sm:$0x3]
    %s1247 = scalar_lea.vmem %s4, 5
    %v1248 = vld [vmem:[%s1247] ss:$8 sm:$0x3]
    %v1250 = vlaneseq
    %v1251 = vshrl.u32 %v1250, 7
    %v1252 = vsub.s32 0, %v1251
    %v1253 = vrot.slane %v1238, %v1252
    %v1254 = vlaneseq
    %v1255 = vshrl.u32 %v1254, 7
    %v1256 = vsub.s32 1, %v1255
    %v1257 = vrot.slane %v1238, %v1256
    %v1260 = vadd.f32 %v451, %v1253
    %v1261 = vadd.f32 %v453, %v1257
    %v1263 = vlaneseq
    %v1264 = vshrl.u32 %v1263, 7
    %v1265 = vsub.s32 0, %v1264
    %v1266 = vrot.slane %v1240, %v1265
    %v1267 = vlaneseq
    %v1268 = vshrl.u32 %v1267, 7
    %v1269 = vsub.s32 1, %v1268
    %v1270 = vrot.slane %v1240, %v1269
    %v1273 = vadd.f32 %v1150, %v1266
    %v1274 = vadd.f32 %v1152, %v1270
    %1275 = vmatprep.subr.mxu0 0.0
    %1276 = vmatpush1.xpose.msra.mxu0 0.0
    %1277 = vmatprep.subr.mxu0 0.0
    %1278 = vmatpush1.xpose.msra.mxu0 0.0
    %1279 = vmatprep.subr.mxu0 0.0
    %1280 = vmatpush1.xpose.msra.mxu0 0.0
    %1281 = vmatprep.subr.mxu0 0.0
    %1282 = vmatpush1.xpose.msra.mxu0 0.0
    %1283 = vmatprep.subr.mxu0 0.0
    %1284 = vmatpush1.xpose.msra.mxu0 0.0
    %1285 = vmatprep.subr.mxu0 0.0
    %1286 = vmatpush1.xpose.msra.mxu0 0.0
    %1287 = vmatprep.subr.mxu0 0.0
    %1288 = vmatpush1.xpose.msra.mxu0 0.0
    %1289 = vmatprep.subr.mxu0 0.0
    %1290 = vmatpush1.xpose.msra.mxu0 0.0
    %1291 = vmatprep.subr.mxu0 0.0
    %1292 = vmatpush1.xpose.msra.mxu0 0.0
    %1293 = vmatprep.subr.mxu0 0.0
    %1294 = vmatpush1.xpose.msra.mxu0 0.0
    %1295 = vmatprep.subr.mxu0 0.0
    %1296 = vmatpush1.xpose.msra.mxu0 0.0
    %1297 = vmatprep.subr.mxu0 0.0
    %1298 = vmatpush1.xpose.msra.mxu0 0.0
    %1299 = vmatprep.subr.mxu0 0.0
    %1300 = vmatpush1.xpose.msra.mxu0 0.0
    %1301 = vmatprep.subr.mxu0 0.0
    %1302 = vmatpush1.xpose.msra.mxu0 0.0
    %1303 = vmatprep.subr.mxu0 0.0
    %1304 = vmatpush1.xpose.msra.mxu0 0.0
    %1305 = vmatprep.subr.mxu0 %v1274
    %1306 = vmatpush1.xpose.msra.mxu0 %v1273
    %1307 = vmatprep.subr.mxu0 0.0
    %1308 = vmatpush2.xpose.msra.mxu0 0.0
    %1309 = vmatprep.subr.mxu0 0.0
    %1310 = vmatpush2.xpose.msra.mxu0 0.0
    %1311 = vmatprep.subr.mxu0 0.0
    %1312 = vmatpush2.xpose.msra.mxu0 0.0
    %1313 = vmatprep.subr.mxu0 0.0
    %1314 = vmatpush2.xpose.msra.mxu0 0.0
    %1315 = vmatprep.subr.mxu0 0.0
    %1316 = vmatpush2.xpose.msra.mxu0 0.0
    %1317 = vmatprep.subr.mxu0 0.0
    %1318 = vmatpush2.xpose.msra.mxu0 0.0
    %1319 = vmatprep.subr.mxu0 0.0
    %1320 = vmatpush2.xpose.msra.mxu0 0.0
    %1321 = vmatprep.subr.mxu0 0.0
    %1322 = vmatpush2.xpose.msra.mxu0 0.0
    %1323 = vmatprep.subr.mxu0 0.0
    %1324 = vmatpush2.xpose.msra.mxu0 0.0
    %1325 = vmatprep.subr.mxu0 0.0
    %1326 = vmatpush2.xpose.msra.mxu0 0.0
    %1327 = vmatprep.subr.mxu0 0.0
    %1328 = vmatpush2.xpose.msra.mxu0 0.0
    %1329 = vmatprep.subr.mxu0 0.0
    %1330 = vmatpush2.xpose.msra.mxu0 0.0
    %1331 = vmatprep.subr.mxu0 0.0
    %1332 = vmatpush2.xpose.msra.mxu0 0.0
    %1333 = vmatprep.subr.mxu0 0.0
    %1334 = vmatpush2.xpose.msra.mxu0 0.0
    %1335 = vmatprep.subr.mxu0 0.0
    %1336 = vmatpush2.xpose.msra.mxu0 0.0
    %1337 = vmatprep.subr.mxu0 0.0
    %1338 = vmatpush2.xpose.msra.mxu0 0.0
    %1339 = vmatprep.mubr.f32.mxu0 %v1261
    %1340 = vmatmul.mubr.f32.gmra.mxu0 %v1260
    %v1341 = vpop.f32.mrf.mxu0
    %v1342 = vadd.f32 0.0, %v1341
    %v1343 = vpop.f32.mrf.mxu0
    %1344 = vdwg.mxu0
    %v1345 = vmul.f32 %v1342, 0.0625
    %vm1346 = vcmask 64512
    %v1347 = vsel %vm1346, %v1345, -inf
    %1348 = vmax.xlane.f32.xlu0 %v1347
    %v1349 = vpop.xlane.xlu0 %1348
    %v1350 = vsub.f32 %v1345, %v1349
    %v1351 = vmul.f32 %v1350, 1.442695
    %v1352 = vpow.pop %v1351
    %v1353 = vsel %vm1346, %v1352, 0.0
    %1354 = vadd.xlane.f32.xlu0 %v1353
    %v1355 = vpop.xlane.xlu0 %1354
    %v1356 = vrcp.pop %v1355
    %v1357 = vmul.f32 %v1352, %v1356
    %v1359 = vlaneseq
    %v1360 = vshrl.u32 %v1359, 7
    %v1361 = vsub.s32 0, %v1360
    %v1362 = vrot.slane %v1242, %v1361
    %v1363 = vlaneseq
    %v1364 = vshrl.u32 %v1363, 7
    %v1365 = vsub.s32 1, %v1364
    %v1366 = vrot.slane %v1242, %v1365
    %v1369 = vmul.f32 %v492, %v1362
    %v1370 = vmul.f32 %v494, %v1366
    %v1372 = vlaneseq
    %v1373 = vshrl.u32 %v1372, 7
    %v1374 = vsub.s32 0, %v1373
    %v1375 = vrot.slane %v1244, %v1374
    %v1376 = vlaneseq
    %v1377 = vshrl.u32 %v1376, 7
    %v1378 = vsub.s32 1, %v1377
    %v1379 = vrot.slane %v1244, %v1378
    %v1382 = vadd.f32 %v1369, %v1375
    %v1383 = vadd.f32 %v1370, %v1379
    %v1384 = vmax.f32 %v1382, 0.0
    %v1385 = vmax.f32 %v1383, 0.0
    %v1387 = vsel %vm1346, %v1357, 0
    %1389 = vmatprep.subr.mxu0 0.0
    %1390 = vmatpush1.msra.mxu0 0.0
    %1391 = vmatprep.subr.mxu0 0.0
    %1392 = vmatpush1.msra.mxu0 0.0
    %1393 = vmatprep.subr.mxu0 0.0
    %1394 = vmatpush1.msra.mxu0 0.0
    %1395 = vmatprep.subr.mxu0 0.0
    %1396 = vmatpush1.msra.mxu0 0.0
    %1397 = vmatprep.subr.mxu0 0.0
    %1398 = vmatpush1.msra.mxu0 0.0
    %1399 = vmatprep.subr.mxu0 0.0
    %1400 = vmatpush1.msra.mxu0 0.0
    %1401 = vmatprep.subr.mxu0 0.0
    %1402 = vmatpush1.msra.mxu0 0.0
    %1403 = vmatprep.subr.mxu0 0.0
    %1404 = vmatpush1.msra.mxu0 0.0
    %1405 = vmatprep.subr.mxu0 0.0
    %1406 = vmatpush1.msra.mxu0 0.0
    %1407 = vmatprep.subr.mxu0 0.0
    %1408 = vmatpush1.msra.mxu0 0.0
    %1409 = vmatprep.subr.mxu0 0.0
    %1410 = vmatpush1.msra.mxu0 0.0
    %1411 = vmatprep.subr.mxu0 0.0
    %1412 = vmatpush1.msra.mxu0 0.0
    %1413 = vmatprep.subr.mxu0 0.0
    %1414 = vmatpush1.msra.mxu0 0.0
    %1415 = vmatprep.subr.mxu0 0.0
    %1416 = vmatpush1.msra.mxu0 0.0
    %1417 = vmatprep.subr.mxu0 0.0
    %1418 = vmatpush1.msra.mxu0 0.0
    %1419 = vmatprep.subr.mxu0 %v1234
    %1420 = vmatpush1.msra.mxu0 %v1232
    %1421 = vmatprep.subr.mxu0 0.0
    %1422 = vmatpush2.msra.mxu0 0.0
    %1423 = vmatprep.subr.mxu0 0.0
    %1424 = vmatpush2.msra.mxu0 0.0
    %1425 = vmatprep.subr.mxu0 0.0
    %1426 = vmatpush2.msra.mxu0 0.0
    %1427 = vmatprep.subr.mxu0 0.0
    %1428 = vmatpush2.msra.mxu0 0.0
    %1429 = vmatprep.subr.mxu0 0.0
    %1430 = vmatpush2.msra.mxu0 0.0
    %1431 = vmatprep.subr.mxu0 0.0
    %1432 = vmatpush2.msra.mxu0 0.0
    %1433 = vmatprep.subr.mxu0 0.0
    %1434 = vmatpush2.msra.mxu0 0.0
    %1435 = vmatprep.subr.mxu0 0.0
    %1436 = vmatpush2.msra.mxu0 0.0
    %1437 = vmatprep.subr.mxu0 0.0
    %1438 = vmatpush2.msra.mxu0 0.0
    %1439 = vmatprep.subr.mxu0 0.0
    %1440 = vmatpush2.msra.mxu0 0.0
    %1441 = vmatprep.subr.mxu0 0.0
    %1442 = vmatpush2.msra.mxu0 0.0
    %1443 = vmatprep.subr.mxu0 0.0
    %1444 = vmatpush2.msra.mxu0 0.0
    %1445 = vmatprep.subr.mxu0 0.0
    %1446 = vmatpush2.msra.mxu0 0.0
    %1447 = vmatprep.subr.mxu0 0.0
    %1448 = vmatpush2.msra.mxu0 0.0
    %1449 = vmatprep.subr.mxu0 0.0
    %1450 = vmatpush2.msra.mxu0 0.0
    %1451 = vmatprep.subr.mxu0 0.0
    %1452 = vmatpush2.msra.mxu0 0.0
    %1453 = vmatprep.mubr.f32.mxu0 0.0
    %1454 = vmatmul.mubr.f32.gmra.mxu0 %v1387
    %v1455 = vpop.f32.mrf.mxu0
    %v1456 = vadd.f32 %v1384, %v1455
    %v1457 = vpop.f32.mrf.mxu0
    %v1458 = vadd.f32 %v1385, %v1457
    %1459 = vdwg.mxu0
    %v1461 = vlaneseq
    %v1462 = vshrl.u32 %v1461, 7
    %v1463 = vsub.s32 0, %v1462
    %v1464 = vrot.slane %v1246, %v1463
    %v1465 = vlaneseq
    %v1466 = vshrl.u32 %v1465, 7
    %v1467 = vsub.s32 1, %v1466
    %v1468 = vrot.slane %v1246, %v1467
    %v1471 = vmul.f32 %v1456, %v1464
    %v1472 = vmul.f32 %v1458, %v1468
    %v1474 = vlaneseq
    %v1475 = vshrl.u32 %v1474, 7
    %v1476 = vsub.s32 0, %v1475
    %v1477 = vrot.slane %v1248, %v1476
    %v1478 = vlaneseq
    %v1479 = vshrl.u32 %v1478, 7
    %v1480 = vsub.s32 1, %v1479
    %v1481 = vrot.slane %v1248, %v1480
    %v1484 = vadd.f32 %v1471, %v1477
    %v1485 = vadd.f32 %v1472, %v1481
    %1486 = vst [vmem:[#allocation2] sm:$0xff] %v1484
    %1487 = vst [vmem:[#allocation2 + $0x8] sm:$0xff] %v1485
    // Predicated region
    $region22: #{cross_attention.1} parent=1 // pred_check
      _
    $region23: #{cross_attention.1} parent=1 // pred_check_branch
      %1489 = sbr.rel (0) target = $region25
    $region24: #{cross_attention.1} parent=1 // pred_region
      %s1491 = ssub.s32 256, 256
      %1492 = vsyncadd [#allocation3], %s1491
      %s1494 = sshll.u32 [#allocation2], 4
      %s1495 = int_to_ptr.vmem [resolvable:$true] %s1494
      %1497 = dma.vmem_to_hbm [thread:$0]  %s1495, 256, %s5, [#allocation3]
    $region25: #{cross_attention.1} parent=1 // pred_fallthru
      _
    // Predicated region
    $region26: #{cross_attention.1} parent=1 // pred_check
      _
    $region27: #{cross_attention.1} parent=1 // pred_check_branch
      %1499 = sbr.rel (0) target = $region29
    $region28: #{cross_attention.1} parent=1 // pred_region
      %1500 = dma.done [#allocation3], 256
    $region29: #{cross_attention.1} parent=1 // pred_fallthru
      _
    %1501 = vsyncpa [#allocation3], 1

</llo_original>
